<compile_context>
chip_gen: v7x
topology: tpu7x:2x2x1
jax: 0.10.0
libtpu: 0.0.40
codegen_flags: <defaults>
</compile_context>

<pallas_src>
import functools

import jax
import jax.numpy as jnp
from jax.experimental import pallas as pl
from jax.experimental.pallas import tpu as pltpu

_EPS = 1e-5
_LANE = 128
_SUBLANE = 8
# Above the 32 MiB scoped default, below v7x's 64 MiB physical VMEM.
_VMEM_LIMIT = 48 * 1024 * 1024


def _round_up(x, m):
    return (x + m - 1) // m * m


def _pad2(a, rows, cols):
    r, c = a.shape
    if r == rows and c == cols:
        return a
    return jnp.pad(a, ((0, rows - r), (0, cols - c)))


# ---------------------------------------------------------------------------
# Kernel bodies
# ---------------------------------------------------------------------------

def _matmul_stats_kernel(*refs, prenorm_relu, tile_n, n_valid, masked):
    """Linear layer + per-feature sum / sum-of-squares accumulation.

    Optionally applies the previous layer's BatchNorm (precomputed scale/shift)
    + ReLU to the input tile before the matmul.  Grid axis 0 tiles the batch and
    must be 'arbitrary' (sequential) because the stats scratch accumulates
    across tiles.
    """
    if prenorm_relu:
        (x_ref, scale_ref, shift_ref, w_ref,
         h_ref, sum_ref, sq_ref, sum_sc, sq_sc) = refs
    else:
        x_ref, w_ref, h_ref, sum_ref, sq_ref, sum_sc, sq_sc = refs

    i = pl.program_id(0)

    @pl.when(i == 0)
    def _():
        sum_sc[...] = jnp.zeros_like(sum_sc)
        sq_sc[...] = jnp.zeros_like(sq_sc)

    a = x_ref[...]
    if prenorm_relu:
        # Fused BN (scale/shift from full-batch stats) + ReLU: one FMA + max.
        a = jnp.maximum(a * scale_ref[...] + shift_ref[...], 0.0)

    y = jnp.dot(a, w_ref[...], preferred_element_type=jnp.float32)
    h_ref[...] = y

    if masked:
        # Exclude zero-padded batch rows from the BN statistics.
        row = i * tile_n + jax.lax.broadcasted_iota(jnp.int32, (tile_n, 1), 0)
        ym = jnp.where(row < n_valid, y, 0.0)
    else:
        ym = y
    sum_sc[...] += jnp.sum(ym, axis=0, keepdims=True)
    sq_sc[...] += jnp.sum(ym * ym, axis=0, keepdims=True)

    @pl.when(i == pl.num_programs(0) - 1)
    def _():
        sum_ref[...] = sum_sc[...]
        sq_ref[...] = sq_sc[...]


def _bn_affine_kernel(h_ref, scale_ref, shift_ref, o_ref):
    # BN applied as a single fused scale/shift.
    o_ref[...] = h_ref[...] * scale_ref[...] + shift_ref[...]


def _bn_relu_matmul_bias_kernel(h_ref, scale_ref, shift_ref, w_ref, b_ref, o_ref):
    # (BN -> ReLU) of the previous layer fused with the final Linear (+bias).
    a = jnp.maximum(h_ref[...] * scale_ref[...] + shift_ref[...], 0.0)
    o_ref[...] = (jnp.dot(a, w_ref[...], preferred_element_type=jnp.float32)
                  + b_ref[...])


# ---------------------------------------------------------------------------
# pallas_call wrappers
# ---------------------------------------------------------------------------

def _linear_bn_stats(x, w, n_valid, prenorm=None, *, tile_n_max):
    n_pad, f_in = x.shape
    f_out = w.shape[1]
    tile_n = min(tile_n_max, n_pad)
    grid = (n_pad // tile_n,)
    prenorm_relu = prenorm is not None

    kernel = functools.partial(
        _matmul_stats_kernel, prenorm_relu=prenorm_relu, tile_n=tile_n,
        n_valid=n_valid, masked=(n_pad != n_valid))

    args = [x]
    in_specs = [pl.BlockSpec((tile_n, f_in), lambda i: (i, 0))]
    if prenorm_relu:
        scale, shift = prenorm
        args += [scale, shift]
        in_specs += [pl.BlockSpec((1, f_in), lambda i: (0, 0)),
                     pl.BlockSpec((1, f_in), lambda i: (0, 0))]
    args.append(w)
    in_specs.append(pl.BlockSpec((f_in, f_out), lambda i: (0, 0)))  # resident

    flops = 2 * n_pad * f_in * f_out + 4 * n_pad * f_out
    bytes_accessed = 4 * (n_pad * f_in + f_in * f_out + n_pad * f_out
                          + (2 * f_in if prenorm_relu else 0) + 2 * f_out)

    return pl.pallas_call(
        kernel,
        out_shape=(jax.ShapeDtypeStruct((n_pad, f_out), jnp.float32),
                   jax.ShapeDtypeStruct((1, f_out), jnp.float32),
                   jax.ShapeDtypeStruct((1, f_out), jnp.float32)),
        grid=grid,
        in_specs=in_specs,
        out_specs=(pl.BlockSpec((tile_n, f_out), lambda i: (i, 0)),
                   pl.BlockSpec((1, f_out), lambda i: (0, 0)),
                   pl.BlockSpec((1, f_out), lambda i: (0, 0))),
        scratch_shapes=[pltpu.VMEM((1, f_out), jnp.float32),
                        pltpu.VMEM((1, f_out), jnp.float32)],
        compiler_params=pltpu.CompilerParams(
            dimension_semantics=("arbitrary",),
            vmem_limit_bytes=_VMEM_LIMIT),
        cost_estimate=pl.CostEstimate(flops=flops, transcendentals=0,
                                      bytes_accessed=bytes_accessed),
    )(*args)


def _bn_apply(h, scale, shift, *, tile_n_max):
    n_pad, f = h.shape
    tile_n = min(tile_n_max, n_pad)
    return pl.pallas_call(
        _bn_affine_kernel,
        out_shape=jax.ShapeDtypeStruct((n_pad, f), jnp.float32),
        grid=(n_pad // tile_n,),
        in_specs=[pl.BlockSpec((tile_n, f), lambda i: (i, 0)),
                  pl.BlockSpec((1, f), lambda i: (0, 0)),
                  pl.BlockSpec((1, f), lambda i: (0, 0))],
        out_specs=pl.BlockSpec((tile_n, f), lambda i: (i, 0)),
        compiler_params=pltpu.CompilerParams(
            dimension_semantics=("parallel",),
            vmem_limit_bytes=_VMEM_LIMIT),
        cost_estimate=pl.CostEstimate(flops=2 * n_pad * f, transcendentals=0,
                                      bytes_accessed=4 * (2 * n_pad * f + 2 * f)),
    )(h, scale, shift)


def _bn_relu_linear_bias(h, scale, shift, w, b, *, tile_n_max):
    n_pad, f_in = h.shape
    f_out = w.shape[1]
    tile_n = min(tile_n_max, n_pad)
    return pl.pallas_call(
        _bn_relu_matmul_bias_kernel,
        out_shape=jax.ShapeDtypeStruct((n_pad, f_out), jnp.float32),
        grid=(n_pad // tile_n,),
        in_specs=[pl.BlockSpec((tile_n, f_in), lambda i: (i, 0)),
                  pl.BlockSpec((1, f_in), lambda i: (0, 0)),
                  pl.BlockSpec((1, f_in), lambda i: (0, 0)),
                  pl.BlockSpec((f_in, f_out), lambda i: (0, 0)),
                  pl.BlockSpec((1, f_out), lambda i: (0, 0))],
        out_specs=pl.BlockSpec((tile_n, f_out), lambda i: (i, 0)),
        compiler_params=pltpu.CompilerParams(
            dimension_semantics=("parallel",),
            vmem_limit_bytes=_VMEM_LIMIT),
        cost_estimate=pl.CostEstimate(
            flops=2 * n_pad * f_in * f_out + 3 * n_pad * f_in,
            transcendentals=0,
            bytes_accessed=4 * (n_pad * f_in + f_in * f_out + n_pad * f_out
                                + 2 * f_in + f_out)),
    )(h, scale, shift, w, b)


def _bn_scale_shift(s, q, gamma, beta, n):
    """Training-mode BatchNorm1d: batch mean, biased variance, eps=1e-5."""
    mu = s / n
    var = jnp.maximum(q / n - mu * mu, 0.0)
    inv = 1.0 / jnp.sqrt(var + _EPS)
    scale = gamma * inv
    shift = beta - mu * scale
    return scale, shift


# ---------------------------------------------------------------------------
# SiameseArm forward (minus the external encoder): returns (y, z, h)
# ---------------------------------------------------------------------------

def siamese_arm_forward(y_feat, params, *, tile_n_max=256):
    assert tile_n_max % _SUBLANE == 0
    n, in_dim = y_feat.shape
    proj, pred = params["proj"], params["pred"]
    proj_dim = proj["w1"].shape[1]     # projector hidden == projector out
    pred_hidden = pred["w1"].shape[1]
    out_dim = pred["w2"].shape[1]

    # Pad: batch to a multiple of the tile (>= 8), features to lane multiples.
    tile_n = min(tile_n_max, _round_up(n, _SUBLANE))
    n_pad = _round_up(n, tile_n)
    in_p = _round_up(in_dim, _LANE)
    pj_p = _round_up(proj_dim, _LANE)
    ph_p = _round_up(pred_hidden, _LANE)
    out_p = _round_up(out_dim, _LANE)

    xp = _pad2(y_feat.astype(jnp.float32), n_pad, in_p)

    w1 = _pad2(proj["w1"], in_p, pj_p)
    w2 = _pad2(proj["w2"], pj_p, pj_p)
    w3 = _pad2(proj["w3"], pj_p, pj_p)
    g1, be1 = _pad2(proj["g1"], 1, pj_p), _pad2(proj["be1"], 1, pj_p)
    g2, be2 = _pad2(proj["g2"], 1, pj_p), _pad2(proj["be2"], 1, pj_p)
    g3, be3 = _pad2(proj["g3"], 1, pj_p), _pad2(proj["be3"], 1, pj_p)

    wp1 = _pad2(pred["w1"], pj_p, ph_p)
    gp1, bep1 = _pad2(pred["g1"], 1, ph_p), _pad2(pred["be1"], 1, ph_p)
    wp2 = _pad2(pred["w2"], ph_p, out_p)
    bp2 = _pad2(pred["b2"], 1, out_p)

    # ---- projector: 3 x (Linear -> BN [-> ReLU]).  Linear biases before a
    # training-mode BN are dropped: the mean subtraction cancels them exactly.
    h1, s1, q1 = _linear_bn_stats(xp, w1, n, tile_n_max=tile_n_max)
    sc1, sh1 = _bn_scale_shift(s1, q1, g1, be1, n)
    h2, s2, q2 = _linear_bn_stats(h1, w2, n, prenorm=(sc1, sh1),
                                  tile_n_max=tile_n_max)
    sc2, sh2 = _bn_scale_shift(s2, q2, g2, be2, n)
    h3, s3, q3 = _linear_bn_stats(h2, w3, n, prenorm=(sc2, sh2),
                                  tile_n_max=tile_n_max)
    sc3, sh3 = _bn_scale_shift(s3, q3, g3, be3, n)
    z_pad = _bn_apply(h3, sc3, sh3, tile_n_max=tile_n_max)

    # ---- predictor: Linear -> BN -> ReLU -> Linear(+bias).
    h4, s4, q4 = _linear_bn_stats(z_pad, wp1, n, tile_n_max=tile_n_max)
    sc4, sh4 = _bn_scale_shift(s4, q4, gp1, bep1, n)
    hp_pad = _bn_relu_linear_bias(h4, sc4, sh4, wp2, bp2, tile_n_max=tile_n_max)

    z = z_pad[:n, :proj_dim]
    h = hp_pad[:n, :out_dim]
    return y_feat, z, h


# ---------------------------------------------------------------------------
# Parameters (deterministic synthetic init, shapes match the PyTorch module)
# ---------------------------------------------------------------------------

def init_params(key, in_dim, proj_dim, pred_hidden):
    ks = jax.random.split(key, 20)

    def linear(kw, kb, fi, fo):
        w = jax.random.normal(kw, (fi, fo), jnp.float32) * 0.05
        b = jax.random.normal(kb, (1, fo), jnp.float32) * 0.05
        return w, b

    def bn(kg, kb, f):
        g = 1.0 + 0.1 * jax.random.normal(kg, (1, f), jnp.float32)
        be = 0.1 * jax.random.normal(kb, (1, f), jnp.float32)
        return g, be

    w1, b1 = linear(ks[0], ks[1], in_dim, proj_dim)
    g1, be1 = bn(ks[2], ks[3], proj_dim)
    w2, b2 = linear(ks[4], ks[5], proj_dim, proj_dim)
    g2, be2 = bn(ks[6], ks[7], proj_dim)
    # ProjectionMLP layer3 applies BatchNorm1d(hidden) to the output fc, which
    # (as in SiameseArm's hua_mlp usage) requires out_dim == hidden_dim.
    w3, b3 = linear(ks[8], ks[9], proj_dim, proj_dim)
    g3, be3 = bn(ks[10], ks[11], proj_dim)
    proj = dict(w1=w1, b1=b1, g1=g1, be1=be1,
                w2=w2, b2=b2, g2=g2, be2=be2,
                w3=w3, b3=b3, g3=g3, be3=be3)

    wp1, bp1 = linear(ks[12], ks[13], proj_dim, pred_hidden)
    gp1, bep1 = bn(ks[14], ks[15], pred_hidden)
    wp2, bp2 = linear(ks[16], ks[17], pred_hidden, proj_dim)
    pred = dict(w1=wp1, b1=bp1, g1=gp1, be1=bep1, w2=wp2, b2=bp2)
    return dict(proj=proj, pred=pred)


# ---------------------------------------------------------------------------
# Pure-JAX reference (mirrors the PyTorch module exactly, biases included)
# ---------------------------------------------------------------------------

def reference_forward(y_feat, params):
    def bn(h, g, be):
        mu = h.mean(0, keepdims=True)
        var = ((h - mu) ** 2).mean(0, keepdims=True)
        return g * (h - mu) / jnp.sqrt(var + _EPS) + be

    p, q = params["proj"], params["pred"]
    h = jnp.maximum(bn(y_feat @ p["w1"] + p["b1"], p["g1"], p["be1"]), 0.0)
    h = jnp.maximum(bn(h @ p["w2"] + p["b2"], p["g2"], p["be2"]), 0.0)
    z = bn(h @ p["w3"] + p["b3"], p["g3"], p["be3"])
    t = jnp.maximum(bn(z @ q["w1"] + q["b1"], q["g1"], q["be1"]), 0.0)
    hp = t @ q["w2"] + q["b2"]
    return y_feat, z, hp


if __name__ == "__main__":
    # Small shapes consistent with SiameseArm(hua_mlp=True):
    # encoder feature dim 64, projector hidden/out 32, predictor hidden 48.
    N, IN_DIM, PROJ_DIM, PRED_HIDDEN = 8, 64, 32, 48

    key = jax.random.PRNGKey(0)
    kx, kp = jax.random.split(key)
    y_feat = jax.random.normal(kx, (N, IN_DIM), jnp.float32)
    params = init_params(kp, IN_DIM, PROJ_DIM, PRED_HIDDEN)

    fwd = jax.jit(functools.partial(siamese_arm_forward, tile_n_max=256))
    y, z, h = fwd(y_feat, params)
    jax.block_until_ready((y, z, h))

    y_r, z_r, h_r = reference_forward(y_feat, params)
    assert y.shape == (N, IN_DIM)
    assert z.shape == (N, PROJ_DIM) and h.shape == (N, PROJ_DIM)
    assert jnp.allclose(y, y_r)
    assert jnp.allclose(z, z_r, atol=2e-4, rtol=2e-4)
    assert jnp.allclose(h, h_r, atol=2e-4, rtol=2e-4)

    # Exercise the multi-tile + masked-batch (N not a multiple of tile) path.
    N2 = 20
    y2 = jax.random.normal(jax.random.PRNGKey(1), (N2, IN_DIM), jnp.float32)
    fwd2 = jax.jit(functools.partial(siamese_arm_forward, tile_n_max=8))
    _, z2, h2 = fwd2(y2, params)
    jax.block_until_ready((z2, h2))
    _, z2_r, h2_r = reference_forward(y2, params)
    assert jnp.allclose(z2, z2_r, atol=2e-4, rtol=2e-4)
    assert jnp.allclose(h2, h2_r, atol=2e-4, rtol=2e-4)

    print("KERNEL_OK")
</pallas_src>

<mosaic_0001>
module attributes {stable_mosaic.version = 11 : i64} {
  func.func @_matmul_stats_kernel(%arg0: i32, %arg1: memref<8x128xf32, #tpu.memory_space<vmem>>, %arg2: memref<128x128xf32, #tpu.memory_space<vmem>>, %arg3: memref<8x128xf32, #tpu.memory_space<vmem>>, %arg4: memref<1x128xf32, #tpu.memory_space<vmem>>, %arg5: memref<1x128xf32, #tpu.memory_space<vmem>>, %arg6: memref<1x128xf32, #tpu.memory_space<vmem>>, %arg7: memref<1x128xf32, #tpu.memory_space<vmem>>) attributes {dimension_semantics = [#tpu.dimension_semantics<arbitrary>], iteration_bounds = array<i64: 1>, scalar_prefetch = 0 : i64, scratch_operands = 2 : i64, tpu.core_type = #tpu.core_type<tc>, window_params = [{transform_indices = @transform_0, window_bounds = array<i64: 8, 128>}, {pipeline_mode = #tpu.pipeline_mode<synchronous>, transform_indices = @transform_1, window_bounds = array<i64: 128, 128>}, {transform_indices = @transform_2, window_bounds = array<i64: 8, 128>}, {pipeline_mode = #tpu.pipeline_mode<synchronous>, transform_indices = @transform_3, window_bounds = array<i64: 1, 128>}, {pipeline_mode = #tpu.pipeline_mode<synchronous>, transform_indices = @transform_4, window_bounds = array<i64: 1, 128>}]} {
    %c0_i32 = arith.constant 0 : i32
    %0 = arith.cmpi eq, %arg0, %c0_i32 : i32
    %1 = arith.extui %0 : i1 to i32
    %c0_i32_0 = arith.constant 0 : i32
    %2 = arith.cmpi ne, %1, %c0_i32_0 : i32
    scf.if %2 {
      %cst_18 = arith.constant 0.000000e+00 : f32
      %21 = vector.broadcast %cst_18 : f32 to vector<1x128xf32>
      %c0_19 = arith.constant 0 : index
      %c0_20 = arith.constant 0 : index
      %22 = vector.load %arg6[%c0_19, %c0_20] : memref<1x128xf32, #tpu.memory_space<vmem>>, vector<1x128xf32>
      tpu.vector_store %arg6[%c0_19, %c0_20], %21 {strides = array<i32>} : memref<1x128xf32, #tpu.memory_space<vmem>>, vector<1x128xf32>,
      %cst_21 = arith.constant 0.000000e+00 : f32
      %23 = vector.broadcast %cst_21 : f32 to vector<1x128xf32>
      %c0_22 = arith.constant 0 : index
      %c0_23 = arith.constant 0 : index
      %24 = vector.load %arg7[%c0_22, %c0_23] : memref<1x128xf32, #tpu.memory_space<vmem>>, vector<1x128xf32>
      tpu.vector_store %arg7[%c0_22, %c0_23], %23 {strides = array<i32>} : memref<1x128xf32, #tpu.memory_space<vmem>>, vector<1x128xf32>,
    } else {
    }
    %c0 = arith.constant 0 : index
    %c0_1 = arith.constant 0 : index
    %3 = vector.load %arg1[%c0, %c0_1] : memref<8x128xf32, #tpu.memory_space<vmem>>, vector<8x128xf32>
    %c0_2 = arith.constant 0 : index
    %c0_3 = arith.constant 0 : index
    %4 = vector.load %arg2[%c0_2, %c0_3] : memref<128x128xf32, #tpu.memory_space<vmem>>, vector<128x128xf32>
    %cst = arith.constant dense<0.000000e+00> : vector<8x128xf32>
    %5 = tpu.matmul %3, %4, %cst {dimension_numbers = #tpu.dot_dimension_numbers<[1], [0], [0], [1], [0, 0, 1, 1], [], []>} : vector<8x128xf32>, vector<128x128xf32>, vector<8x128xf32> -> vector<8x128xf32>
    %c0_4 = arith.constant 0 : index
    %c0_5 = arith.constant 0 : index
    %6 = vector.load %arg3[%c0_4, %c0_5] : memref<8x128xf32, #tpu.memory_space<vmem>>, vector<8x128xf32>
    tpu.vector_store %arg3[%c0_4, %c0_5], %5 {strides = array<i32>} : memref<8x128xf32, #tpu.memory_space<vmem>>, vector<8x128xf32>,
    %c0_6 = arith.constant 0 : index
    %c0_7 = arith.constant 0 : index
    %7 = vector.load %arg6[%c0_6, %c0_7] : memref<1x128xf32, #tpu.memory_space<vmem>>, vector<1x128xf32>
    %cst_8 = arith.constant dense<0.000000e+00> : vector<128xf32>
    %8 = vector.multi_reduction <add>, %5, %cst_8 [0] : vector<8x128xf32> to vector<128xf32>
    %9 = vector.shape_cast %8 : vector<128xf32> to vector<1x128xf32>
    %10 = arith.addf %7, %9 : vector<1x128xf32>
    %c0_9 = arith.constant 0 : index
    %c0_10 = arith.constant 0 : index
    %11 = vector.load %arg6[%c0_9, %c0_10] : memref<1x128xf32, #tpu.memory_space<vmem>>, vector<1x128xf32>
    tpu.vector_store %arg6[%c0_9, %c0_10], %10 {strides = array<i32>} : memref<1x128xf32, #tpu.memory_space<vmem>>, vector<1x128xf32>,
    %c0_11 = arith.constant 0 : index
    %c0_12 = arith.constant 0 : index
    %12 = vector.load %arg7[%c0_11, %c0_12] : memref<1x128xf32, #tpu.memory_space<vmem>>, vector<1x128xf32>
    %13 = arith.mulf %5, %5 : vector<8x128xf32>
    %cst_13 = arith.constant dense<0.000000e+00> : vector<128xf32>
    %14 = vector.multi_reduction <add>, %13, %cst_13 [0] : vector<8x128xf32> to vector<128xf32>
    %15 = vector.shape_cast %14 : vector<128xf32> to vector<1x128xf32>
    %16 = arith.addf %12, %15 : vector<1x128xf32>
    %c0_14 = arith.constant 0 : index
    %c0_15 = arith.constant 0 : index
    %17 = vector.load %arg7[%c0_14, %c0_15] : memref<1x128xf32, #tpu.memory_space<vmem>>, vector<1x128xf32>
    tpu.vector_store %arg7[%c0_14, %c0_15], %16 {strides = array<i32>} : memref<1x128xf32, #tpu.memory_space<vmem>>, vector<1x128xf32>,
    %c0_i32_16 = arith.constant 0 : i32
    %18 = arith.cmpi eq, %arg0, %c0_i32_16 : i32
    %19 = arith.extui %18 : i1 to i32
    %c0_i32_17 = arith.constant 0 : i32
    %20 = arith.cmpi ne, %19, %c0_i32_17 : i32
    scf.if %20 {
      %c0_18 = arith.constant 0 : index
      %c0_19 = arith.constant 0 : index
      %21 = vector.load %arg6[%c0_18, %c0_19] : memref<1x128xf32, #tpu.memory_space<vmem>>, vector<1x128xf32>
      %c0_20 = arith.constant 0 : index
      %c0_21 = arith.constant 0 : index
      %22 = vector.load %arg4[%c0_20, %c0_21] : memref<1x128xf32, #tpu.memory_space<vmem>>, vector<1x128xf32>
      tpu.vector_store %arg4[%c0_20, %c0_21], %21 {strides = array<i32>} : memref<1x128xf32, #tpu.memory_space<vmem>>, vector<1x128xf32>,
      %c0_22 = arith.constant 0 : index
      %c0_23 = arith.constant 0 : index
      %23 = vector.load %arg7[%c0_22, %c0_23] : memref<1x128xf32, #tpu.memory_space<vmem>>, vector<1x128xf32>
      %c0_24 = arith.constant 0 : index
      %c0_25 = arith.constant 0 : index
      %24 = vector.load %arg5[%c0_24, %c0_25] : memref<1x128xf32, #tpu.memory_space<vmem>>, vector<1x128xf32>
      tpu.vector_store %arg5[%c0_24, %c0_25], %23 {strides = array<i32>} : memref<1x128xf32, #tpu.memory_space<vmem>>, vector<1x128xf32>,
    } else {
    }
    return
  }
  func.func @transform_0(%arg0: i32) -> (i32, i32) {
    %c0_i32 = arith.constant 0 : i32
    %c0_i32_0 = arith.constant 0 : i32
    return %arg0, %c0_i32 : i32, i32
  }
  func.func @transform_1(%arg0: i32) -> (i32, i32) {
    %c0_i32 = arith.constant 0 : i32
    %c0_i32_0 = arith.constant 0 : i32
    %c0_i32_1 = arith.constant 0 : i32
    return %c0_i32, %c0_i32_0 : i32, i32
  }
  func.func @transform_2(%arg0: i32) -> (i32, i32) {
    %c0_i32 = arith.constant 0 : i32
    %c0_i32_0 = arith.constant 0 : i32
    return %arg0, %c0_i32 : i32, i32
  }
  func.func @transform_3(%arg0: i32) -> (i32, i32) {
    %c0_i32 = arith.constant 0 : i32
    %c0_i32_0 = arith.constant 0 : i32
    %c0_i32_1 = arith.constant 0 : i32
    return %c0_i32, %c0_i32_0 : i32, i32
  }
  func.func @transform_4(%arg0: i32) -> (i32, i32) {
    %c0_i32 = arith.constant 0 : i32
    %c0_i32_0 = arith.constant 0 : i32
    %c0_i32_1 = arith.constant 0 : i32
    return %c0_i32, %c0_i32_0 : i32, i32
  }
}

module attributes {stable_mosaic.version = 11 : i64} {
  func.func @_bn_affine_kernel(%arg0: i32, %arg1: memref<8x128xf32, #tpu.memory_space<vmem>>, %arg2: memref<1x128xf32, #tpu.memory_space<vmem>>, %arg3: memref<1x128xf32, #tpu.memory_space<vmem>>, %arg4: memref<8x128xf32, #tpu.memory_space<vmem>>) attributes {dimension_semantics = [#tpu.dimension_semantics<parallel>], iteration_bounds = array<i64: 1>, scalar_prefetch = 0 : i64, scratch_operands = 0 : i64, tpu.core_type = #tpu.core_type<tc>, window_params = [{transform_indices = @transform_0, window_bounds = array<i64: 8, 128>}, {pipeline_mode = #tpu.pipeline_mode<synchronous>, transform_indices = @transform_1, window_bounds = array<i64: 1, 128>}, {pipeline_mode = #tpu.pipeline_mode<synchronous>, transform_indices = @transform_2, window_bounds = array<i64: 1, 128>}, {transform_indices = @transform_3, window_bounds = array<i64: 8, 128>}]} {
    %c0 = arith.constant 0 : index
    %c0_0 = arith.constant 0 : index
    %0 = vector.load %arg1[%c0, %c0_0] : memref<8x128xf32, #tpu.memory_space<vmem>>, vector<8x128xf32>
    %c0_1 = arith.constant 0 : index
    %c0_2 = arith.constant 0 : index
    %1 = vector.load %arg2[%c0_1, %c0_2] : memref<1x128xf32, #tpu.memory_space<vmem>>, vector<1x128xf32>
    %2 = vector.broadcast %1 : vector<1x128xf32> to vector<8x128xf32>
    %3 = arith.mulf %0, %2 : vector<8x128xf32>
    %c0_3 = arith.constant 0 : index
    %c0_4 = arith.constant 0 : index
    %4 = vector.load %arg3[%c0_3, %c0_4] : memref<1x128xf32, #tpu.memory_space<vmem>>, vector<1x128xf32>
    %5 = vector.broadcast %4 : vector<1x128xf32> to vector<8x128xf32>
    %6 = arith.addf %3, %5 : vector<8x128xf32>
    %c0_5 = arith.constant 0 : index
    %c0_6 = arith.constant 0 : index
    %7 = vector.load %arg4[%c0_5, %c0_6] : memref<8x128xf32, #tpu.memory_space<vmem>>, vector<8x128xf32>
    tpu.vector_store %arg4[%c0_5, %c0_6], %6 {strides = array<i32>} : memref<8x128xf32, #tpu.memory_space<vmem>>, vector<8x128xf32>,
    return
  }
  func.func @transform_0(%arg0: i32) -> (i32, i32) {
    %c0_i32 = arith.constant 0 : i32
    %c0_i32_0 = arith.constant 0 : i32
    return %arg0, %c0_i32 : i32, i32
  }
  func.func @transform_1(%arg0: i32) -> (i32, i32) {
    %c0_i32 = arith.constant 0 : i32
    %c0_i32_0 = arith.constant 0 : i32
    %c0_i32_1 = arith.constant 0 : i32
    return %c0_i32, %c0_i32_0 : i32, i32
  }
  func.func @transform_2(%arg0: i32) -> (i32, i32) {
    %c0_i32 = arith.constant 0 : i32
    %c0_i32_0 = arith.constant 0 : i32
    %c0_i32_1 = arith.constant 0 : i32
    return %c0_i32, %c0_i32_0 : i32, i32
  }
  func.func @transform_3(%arg0: i32) -> (i32, i32) {
    %c0_i32 = arith.constant 0 : i32
    %c0_i32_0 = arith.constant 0 : i32
    return %arg0, %c0_i32 : i32, i32
  }
}

module attributes {stable_mosaic.version = 11 : i64} {
  func.func @_matmul_stats_kernel(%arg0: i32, %arg1: memref<8x128xf32, #tpu.memory_space<vmem>>, %arg2: memref<1x128xf32, #tpu.memory_space<vmem>>, %arg3: memref<1x128xf32, #tpu.memory_space<vmem>>, %arg4: memref<128x128xf32, #tpu.memory_space<vmem>>, %arg5: memref<8x128xf32, #tpu.memory_space<vmem>>, %arg6: memref<1x128xf32, #tpu.memory_space<vmem>>, %arg7: memref<1x128xf32, #tpu.memory_space<vmem>>, %arg8: memref<1x128xf32, #tpu.memory_space<vmem>>, %arg9: memref<1x128xf32, #tpu.memory_space<vmem>>) attributes {dimension_semantics = [#tpu.dimension_semantics<arbitrary>], iteration_bounds = array<i64: 1>, scalar_prefetch = 0 : i64, scratch_operands = 2 : i64, tpu.core_type = #tpu.core_type<tc>, window_params = [{transform_indices = @transform_0, window_bounds = array<i64: 8, 128>}, {pipeline_mode = #tpu.pipeline_mode<synchronous>, transform_indices = @transform_1, window_bounds = array<i64: 1, 128>}, {pipeline_mode = #tpu.pipeline_mode<synchronous>, transform_indices = @transform_2, window_bounds = array<i64: 1, 128>}, {pipeline_mode = #tpu.pipeline_mode<synchronous>, transform_indices = @transform_3, window_bounds = array<i64: 128, 128>}, {transform_indices = @transform_4, window_bounds = array<i64: 8, 128>}, {pipeline_mode = #tpu.pipeline_mode<synchronous>, transform_indices = @transform_5, window_bounds = array<i64: 1, 128>}, {pipeline_mode = #tpu.pipeline_mode<synchronous>, transform_indices = @transform_6, window_bounds = array<i64: 1, 128>}]} {
    %c0_i32 = arith.constant 0 : i32
    %0 = arith.cmpi eq, %arg0, %c0_i32 : i32
    %1 = arith.extui %0 : i1 to i32
    %c0_i32_0 = arith.constant 0 : i32
    %2 = arith.cmpi ne, %1, %c0_i32_0 : i32
    scf.if %2 {
      %cst_23 = arith.constant 0.000000e+00 : f32
      %29 = vector.broadcast %cst_23 : f32 to vector<1x128xf32>
      %c0_24 = arith.constant 0 : index
      %c0_25 = arith.constant 0 : index
      %30 = vector.load %arg8[%c0_24, %c0_25] : memref<1x128xf32, #tpu.memory_space<vmem>>, vector<1x128xf32>
      tpu.vector_store %arg8[%c0_24, %c0_25], %29 {strides = array<i32>} : memref<1x128xf32, #tpu.memory_space<vmem>>, vector<1x128xf32>,
      %cst_26 = arith.constant 0.000000e+00 : f32
      %31 = vector.broadcast %cst_26 : f32 to vector<1x128xf32>
      %c0_27 = arith.constant 0 : index
      %c0_28 = arith.constant 0 : index
      %32 = vector.load %arg9[%c0_27, %c0_28] : memref<1x128xf32, #tpu.memory_space<vmem>>, vector<1x128xf32>
      tpu.vector_store %arg9[%c0_27, %c0_28], %31 {strides = array<i32>} : memref<1x128xf32, #tpu.memory_space<vmem>>, vector<1x128xf32>,
    } else {
    }
    %c0 = arith.constant 0 : index
    %c0_1 = arith.constant 0 : index
    %3 = vector.load %arg1[%c0, %c0_1] : memref<8x128xf32, #tpu.memory_space<vmem>>, vector<8x128xf32>
    %c0_2 = arith.constant 0 : index
    %c0_3 = arith.constant 0 : index
    %4 = vector.load %arg2[%c0_2, %c0_3] : memref<1x128xf32, #tpu.memory_space<vmem>>, vector<1x128xf32>
    %5 = vector.broadcast %4 : vector<1x128xf32> to vector<8x128xf32>
    %6 = arith.mulf %3, %5 : vector<8x128xf32>
    %c0_4 = arith.constant 0 : index
    %c0_5 = arith.constant 0 : index
    %7 = vector.load %arg3[%c0_4, %c0_5] : memref<1x128xf32, #tpu.memory_space<vmem>>, vector<1x128xf32>
    %8 = vector.broadcast %7 : vector<1x128xf32> to vector<8x128xf32>
    %9 = arith.addf %6, %8 : vector<8x128xf32>
    %cst = arith.constant 0.000000e+00 : f32
    %10 = vector.broadcast %cst : f32 to vector<8x128xf32>
    %11 = arith.maximumf %9, %10 : vector<8x128xf32>
    %c0_6 = arith.constant 0 : index
    %c0_7 = arith.constant 0 : index
    %12 = vector.load %arg4[%c0_6, %c0_7] : memref<128x128xf32, #tpu.memory_space<vmem>>, vector<128x128xf32>
    %cst_8 = arith.constant dense<0.000000e+00> : vector<8x128xf32>
    %13 = tpu.matmul %11, %12, %cst_8 {dimension_numbers = #tpu.dot_dimension_numbers<[1], [0], [0], [1], [0, 0, 1, 1], [], []>} : vector<8x128xf32>, vector<128x128xf32>, vector<8x128xf32> -> vector<8x128xf32>
    %c0_9 = arith.constant 0 : index
    %c0_10 = arith.constant 0 : index
    %14 = vector.load %arg5[%c0_9, %c0_10] : memref<8x128xf32, #tpu.memory_space<vmem>>, vector<8x128xf32>
    tpu.vector_store %arg5[%c0_9, %c0_10], %13 {strides = array<i32>} : memref<8x128xf32, #tpu.memory_space<vmem>>, vector<8x128xf32>,
    %c0_11 = arith.constant 0 : index
    %c0_12 = arith.constant 0 : index
    %15 = vector.load %arg8[%c0_11, %c0_12] : memref<1x128xf32, #tpu.memory_space<vmem>>, vector<1x128xf32>
    %cst_13 = arith.constant dense<0.000000e+00> : vector<128xf32>
    %16 = vector.multi_reduction <add>, %13, %cst_13 [0] : vector<8x128xf32> to vector<128xf32>
    %17 = vector.shape_cast %16 : vector<128xf32> to vector<1x128xf32>
    %18 = arith.addf %15, %17 : vector<1x128xf32>
    %c0_14 = arith.constant 0 : index
    %c0_15 = arith.constant 0 : index
    %19 = vector.load %arg8[%c0_14, %c0_15] : memref<1x128xf32, #tpu.memory_space<vmem>>, vector<1x128xf32>
    tpu.vector_store %arg8[%c0_14, %c0_15], %18 {strides = array<i32>} : memref<1x128xf32, #tpu.memory_space<vmem>>, vector<1x128xf32>,
    %c0_16 = arith.constant 0 : index
    %c0_17 = arith.constant 0 : index
    %20 = vector.load %arg9[%c0_16, %c0_17] : memref<1x128xf32, #tpu.memory_space<vmem>>, vector<1x128xf32>
    %21 = arith.mulf %13, %13 : vector<8x128xf32>
    %cst_18 = arith.constant dense<0.000000e+00> : vector<128xf32>
    %22 = vector.multi_reduction <add>, %21, %cst_18 [0] : vector<8x128xf32> to vector<128xf32>
    %23 = vector.shape_cast %22 : vector<128xf32> to vector<1x128xf32>
    %24 = arith.addf %20, %23 : vector<1x128xf32>
    %c0_19 = arith.constant 0 : index
    %c0_20 = arith.constant 0 : index
    %25 = vector.load %arg9[%c0_19, %c0_20] : memref<1x128xf32, #tpu.memory_space<vmem>>, vector<1x128xf32>
    tpu.vector_store %arg9[%c0_19, %c0_20], %24 {strides = array<i32>} : memref<1x128xf32, #tpu.memory_space<vmem>>, vector<1x128xf32>,
    %c0_i32_21 = arith.constant 0 : i32
    %26 = arith.cmpi eq, %arg0, %c0_i32_21 : i32
    %27 = arith.extui %26 : i1 to i32
    %c0_i32_22 = arith.constant 0 : i32
    %28 = arith.cmpi ne, %27, %c0_i32_22 : i32
    scf.if %28 {
      %c0_23 = arith.constant 0 : index
      %c0_24 = arith.constant 0 : index
      %29 = vector.load %arg8[%c0_23, %c0_24] : memref<1x128xf32, #tpu.memory_space<vmem>>, vector<1x128xf32>
      %c0_25 = arith.constant 0 : index
      %c0_26 = arith.constant 0 : index
      %30 = vector.load %arg6[%c0_25, %c0_26] : memref<1x128xf32, #tpu.memory_space<vmem>>, vector<1x128xf32>
      tpu.vector_store %arg6[%c0_25, %c0_26], %29 {strides = array<i32>} : memref<1x128xf32, #tpu.memory_space<vmem>>, vector<1x128xf32>,
      %c0_27 = arith.constant 0 : index
      %c0_28 = arith.constant 0 : index
      %31 = vector.load %arg9[%c0_27, %c0_28] : memref<1x128xf32, #tpu.memory_space<vmem>>, vector<1x128xf32>
      %c0_29 = arith.constant 0 : index
      %c0_30 = arith.constant 0 : index
      %32 = vector.load %arg7[%c0_29, %c0_30] : memref<1x128xf32, #tpu.memory_space<vmem>>, vector<1x128xf32>
      tpu.vector_store %arg7[%c0_29, %c0_30], %31 {strides = array<i32>} : memref<1x128xf32, #tpu.memory_space<vmem>>, vector<1x128xf32>,
    } else {
    }
    return
  }
  func.func @transform_0(%arg0: i32) -> (i32, i32) {
    %c0_i32 = arith.constant 0 : i32
    %c0_i32_0 = arith.constant 0 : i32
    return %arg0, %c0_i32 : i32, i32
  }
  func.func @transform_1(%arg0: i32) -> (i32, i32) {
    %c0_i32 = arith.constant 0 : i32
    %c0_i32_0 = arith.constant 0 : i32
    %c0_i32_1 = arith.constant 0 : i32
    return %c0_i32, %c0_i32_0 : i32, i32
  }
  func.func @transform_2(%arg0: i32) -> (i32, i32) {
    %c0_i32 = arith.constant 0 : i32
    %c0_i32_0 = arith.constant 0 : i32
    %c0_i32_1 = arith.constant 0 : i32
    return %c0_i32, %c0_i32_0 : i32, i32
  }
  func.func @transform_3(%arg0: i32) -> (i32, i32) {
    %c0_i32 = arith.constant 0 : i32
    %c0_i32_0 = arith.constant 0 : i32
    %c0_i32_1 = arith.constant 0 : i32
    return %c0_i32, %c0_i32_0 : i32, i32
  }
  func.func @transform_4(%arg0: i32) -> (i32, i32) {
    %c0_i32 = arith.constant 0 : i32
    %c0_i32_0 = arith.constant 0 : i32
    return %arg0, %c0_i32 : i32, i32
  }
  func.func @transform_5(%arg0: i32) -> (i32, i32) {
    %c0_i32 = arith.constant 0 : i32
    %c0_i32_0 = arith.constant 0 : i32
    %c0_i32_1 = arith.constant 0 : i32
    return %c0_i32, %c0_i32_0 : i32, i32
  }
  func.func @transform_6(%arg0: i32) -> (i32, i32) {
    %c0_i32 = arith.constant 0 : i32
    %c0_i32_0 = arith.constant 0 : i32
    %c0_i32_1 = arith.constant 0 : i32
    return %c0_i32, %c0_i32_0 : i32, i32
  }
}

module attributes {stable_mosaic.version = 11 : i64} {
  func.func @_bn_relu_matmul_bias_kernel(%arg0: i32, %arg1: memref<8x128xf32, #tpu.memory_space<vmem>>, %arg2: memref<1x128xf32, #tpu.memory_space<vmem>>, %arg3: memref<1x128xf32, #tpu.memory_space<vmem>>, %arg4: memref<128x128xf32, #tpu.memory_space<vmem>>, %arg5: memref<1x128xf32, #tpu.memory_space<vmem>>, %arg6: memref<8x128xf32, #tpu.memory_space<vmem>>) attributes {dimension_semantics = [#tpu.dimension_semantics<parallel>], iteration_bounds = array<i64: 1>, scalar_prefetch = 0 : i64, scratch_operands = 0 : i64, tpu.core_type = #tpu.core_type<tc>, window_params = [{transform_indices = @transform_0, window_bounds = array<i64: 8, 128>}, {pipeline_mode = #tpu.pipeline_mode<synchronous>, transform_indices = @transform_1, window_bounds = array<i64: 1, 128>}, {pipeline_mode = #tpu.pipeline_mode<synchronous>, transform_indices = @transform_2, window_bounds = array<i64: 1, 128>}, {pipeline_mode = #tpu.pipeline_mode<synchronous>, transform_indices = @transform_3, window_bounds = array<i64: 128, 128>}, {pipeline_mode = #tpu.pipeline_mode<synchronous>, transform_indices = @transform_4, window_bounds = array<i64: 1, 128>}, {transform_indices = @transform_5, window_bounds = array<i64: 8, 128>}]} {
    %c0 = arith.constant 0 : index
    %c0_0 = arith.constant 0 : index
    %0 = vector.load %arg1[%c0, %c0_0] : memref<8x128xf32, #tpu.memory_space<vmem>>, vector<8x128xf32>
    %c0_1 = arith.constant 0 : index
    %c0_2 = arith.constant 0 : index
    %1 = vector.load %arg2[%c0_1, %c0_2] : memref<1x128xf32, #tpu.memory_space<vmem>>, vector<1x128xf32>
    %2 = vector.broadcast %1 : vector<1x128xf32> to vector<8x128xf32>
    %3 = arith.mulf %0, %2 : vector<8x128xf32>
    %c0_3 = arith.constant 0 : index
    %c0_4 = arith.constant 0 : index
    %4 = vector.load %arg3[%c0_3, %c0_4] : memref<1x128xf32, #tpu.memory_space<vmem>>, vector<1x128xf32>
    %5 = vector.broadcast %4 : vector<1x128xf32> to vector<8x128xf32>
    %6 = arith.addf %3, %5 : vector<8x128xf32>
    %cst = arith.constant 0.000000e+00 : f32
    %7 = vector.broadcast %cst : f32 to vector<8x128xf32>
    %8 = arith.maximumf %6, %7 : vector<8x128xf32>
    %c0_5 = arith.constant 0 : index
    %c0_6 = arith.constant 0 : index
    %9 = vector.load %arg4[%c0_5, %c0_6] : memref<128x128xf32, #tpu.memory_space<vmem>>, vector<128x128xf32>
    %cst_7 = arith.constant dense<0.000000e+00> : vector<8x128xf32>
    %10 = tpu.matmul %8, %9, %cst_7 {dimension_numbers = #tpu.dot_dimension_numbers<[1], [0], [0], [1], [0, 0, 1, 1], [], []>} : vector<8x128xf32>, vector<128x128xf32>, vector<8x128xf32> -> vector<8x128xf32>
    %c0_8 = arith.constant 0 : index
    %c0_9 = arith.constant 0 : index
    %11 = vector.load %arg5[%c0_8, %c0_9] : memref<1x128xf32, #tpu.memory_space<vmem>>, vector<1x128xf32>
    %12 = vector.broadcast %11 : vector<1x128xf32> to vector<8x128xf32>
    %13 = arith.addf %10, %12 : vector<8x128xf32>
    %c0_10 = arith.constant 0 : index
    %c0_11 = arith.constant 0 : index
    %14 = vector.load %arg6[%c0_10, %c0_11] : memref<8x128xf32, #tpu.memory_space<vmem>>, vector<8x128xf32>
    tpu.vector_store %arg6[%c0_10, %c0_11], %13 {strides = array<i32>} : memref<8x128xf32, #tpu.memory_space<vmem>>, vector<8x128xf32>,
    return
  }
  func.func @transform_0(%arg0: i32) -> (i32, i32) {
    %c0_i32 = arith.constant 0 : i32
    %c0_i32_0 = arith.constant 0 : i32
    return %arg0, %c0_i32 : i32, i32
  }
  func.func @transform_1(%arg0: i32) -> (i32, i32) {
    %c0_i32 = arith.constant 0 : i32
    %c0_i32_0 = arith.constant 0 : i32
    %c0_i32_1 = arith.constant 0 : i32
    return %c0_i32, %c0_i32_0 : i32, i32
  }
  func.func @transform_2(%arg0: i32) -> (i32, i32) {
    %c0_i32 = arith.constant 0 : i32
    %c0_i32_0 = arith.constant 0 : i32
    %c0_i32_1 = arith.constant 0 : i32
    return %c0_i32, %c0_i32_0 : i32, i32
  }
  func.func @transform_3(%arg0: i32) -> (i32, i32) {
    %c0_i32 = arith.constant 0 : i32
    %c0_i32_0 = arith.constant 0 : i32
    %c0_i32_1 = arith.constant 0 : i32
    return %c0_i32, %c0_i32_0 : i32, i32
  }
  func.func @transform_4(%arg0: i32) -> (i32, i32) {
    %c0_i32 = arith.constant 0 : i32
    %c0_i32_0 = arith.constant 0 : i32
    %c0_i32_1 = arith.constant 0 : i32
    return %c0_i32, %c0_i32_0 : i32, i32
  }
  func.func @transform_5(%arg0: i32) -> (i32, i32) {
    %c0_i32 = arith.constant 0 : i32
    %c0_i32_0 = arith.constant 0 : i32
    return %arg0, %c0_i32 : i32, i32
  }
}

</mosaic_0001>

<llo_original>
// kernel: siamese_arm_forward.9
$region0: #{siamese_arm_forward.9}
  #allocation0 [shape = 'u32[]', space=smem, size = 0x4, offset = 0x4, fixed_abs, tag = 'smem constant byte address 0x4 - core index']
  #allocation1 [shape = 'u32[144,128]{1,0:T(1,128)}', space=vmem, size = 0x12000, scoped, tag = 'internal scratch']
  %s0 = inlined_call_operand.vmem [shape: f32[8,128], index: 0, kind: input, shape index: {}]
  %s1 = inlined_call_operand.vmem [shape: f32[1,128], index: 1, kind: input, shape index: {}]
  %s2 = inlined_call_operand.vmem [shape: f32[1,128], index: 2, kind: input, shape index: {}]
  %s3 = inlined_call_operand.vmem [shape: f32[8,128], index: 3, kind: output, shape index: {}]
  %s4 = sld [smem:[#allocation0]]
  $region22: #{siamese_arm_forward.9} parent=0
    _
  %s6 = ssub.s32 1, %s4
  %s7 = scalar_select 0, %s6, %s4
  // Predicated region
  $region2: #{siamese_arm_forward.9} parent=0 // pred_check
    _
  $region3: #{siamese_arm_forward.9} parent=0 // pred_check_branch
    %9 = sbr.rel (0) target = $region5
  $region4: #{siamese_arm_forward.9} parent=0 // pred_region
    _
  $region5: #{siamese_arm_forward.9} parent=0 // pred_fallthru
    _
  // Predicated region
  $region6: #{siamese_arm_forward.9} parent=0 // pred_check
    _
  $region7: #{siamese_arm_forward.9} parent=0 // pred_check_branch
    %11 = sbr.rel (0) target = $region9
  $region8: #{siamese_arm_forward.9} parent=0 // pred_region
    _
  $region9: #{siamese_arm_forward.9} parent=0 // pred_fallthru
    _
  // Predicated region
  $region10: #{siamese_arm_forward.9} parent=0 // pred_check
    _
  $region11: #{siamese_arm_forward.9} parent=0 // pred_check_branch
    %13 = sbr.rel (0) target = $region13
  $region12: #{siamese_arm_forward.9} parent=0 // pred_region
    _
  $region13: #{siamese_arm_forward.9} parent=0 // pred_fallthru
    _
  %v14 = vld [vmem:[%s0] sm:$0xff]
  %v15 = vld [vmem:[%s1] sm:$0x1]
  %v17 = vlaneseq
  %v18 = vshrl.u32 %v17, 7
  %v19 = vsub.s32 0, %v18
  %v20 = vrot.slane %v15, %v19
  %v22 = vmul.f32 %v14, %v20
  %v23 = vld [vmem:[%s2] sm:$0x1]
  %v25 = vlaneseq
  %v26 = vshrl.u32 %v25, 7
  %v27 = vsub.s32 0, %v26
  %v28 = vrot.slane %v23, %v27
  %v30 = vadd.f32 %v22, %v28
  %31 = vst [vmem:[%s3] sm:$0xff] %v30
  // Predicated region
  $region14: #{siamese_arm_forward.9} parent=0 // pred_check
    _
  $region15: #{siamese_arm_forward.9} parent=0 // pred_check_branch
    %33 = sbr.rel (0) target = $region17
  $region16: #{siamese_arm_forward.9} parent=0 // pred_region
    _
  $region17: #{siamese_arm_forward.9} parent=0 // pred_fallthru
    _
  // Predicated region
  $region18: #{siamese_arm_forward.9} parent=0 // pred_check
    _
  $region19: #{siamese_arm_forward.9} parent=0 // pred_check_branch
    %35 = sbr.rel (0) target = $region21
  $region20: #{siamese_arm_forward.9} parent=0 // pred_region
    _
  $region21: #{siamese_arm_forward.9} parent=0 // pred_fallthru
    _

// kernel: siamese_arm_forward.6
$region0: #{siamese_arm_forward.6}
  #allocation0 [shape = 'u32[]', space=smem, size = 0x4, offset = 0x4, fixed_abs, tag = 'smem constant byte address 0x4 - core index']
  #allocation1 [shape = 'u32[144,128]{1,0:T(1,128)}', space=vmem, size = 0x12000, scoped, tag = 'internal scratch']
  #allocation2 [shape = 'f32[1,128]{1,0:T(1,128)}', space=vmem, size = 0x200, scoped, tag = 'scratch operand']
  #allocation3 [shape = 'f32[1,128]{1,0:T(1,128)}', space=vmem, size = 0x200, scoped, tag = 'scratch operand']
  %s0 = inlined_call_operand.vmem [shape: f32[8,128], index: 0, kind: input, shape index: {}]
  %s1 = inlined_call_operand.vmem [shape: f32[128,128], index: 1, kind: input, shape index: {}]
  %s2 = inlined_call_operand.vmem [shape: f32[8,128], index: 2, kind: output, shape index: {0}]
  %s3 = inlined_call_operand.vmem [shape: f32[1,128], index: 3, kind: output, shape index: {1}]
  %s4 = inlined_call_operand.vmem [shape: f32[1,128], index: 4, kind: output, shape index: {2}]
  %5 = xla_tuple %s2, %s3, %s4
  %s6 = sld [smem:[#allocation0]]
  $region42: #{siamese_arm_forward.6} parent=0
    _
  %s8 = ssub.s32 1, %s6
  %s9 = scalar_select 0, %s8, %s6
  // Predicated region
  $region2: #{siamese_arm_forward.6} parent=0 // pred_check
    _
  $region3: #{siamese_arm_forward.6} parent=0 // pred_check_branch
    %11 = sbr.rel (0) target = $region5
  $region4: #{siamese_arm_forward.6} parent=0 // pred_region
    _
  $region5: #{siamese_arm_forward.6} parent=0 // pred_fallthru
    _
  // Predicated region
  $region6: #{siamese_arm_forward.6} parent=0 // pred_check
    _
  $region7: #{siamese_arm_forward.6} parent=0 // pred_check_branch
    %13 = sbr.rel (0) target = $region9
  $region8: #{siamese_arm_forward.6} parent=0 // pred_region
    _
  $region9: #{siamese_arm_forward.6} parent=0 // pred_fallthru
    _
  %p14 = scmp.eq.s32.totalorder 0, 0
  // Predicated region
  $region10: #{siamese_arm_forward.6} parent=0 // pred_check
    %p15 = pneg %p14
  $region11: #{siamese_arm_forward.6} parent=0 // pred_check_branch
    %17 = sbr.rel (%p15) target = $region13
  $region12: #{siamese_arm_forward.6} parent=0 // pred_region
    %18 = vst [vmem:[#allocation2] sm:$0x1] 0.0
    %19 = vst [vmem:[#allocation3] sm:$0x1] 0.0
  $region13: #{siamese_arm_forward.6} parent=0 // pred_fallthru
    _
  %v20 = vld [vmem:[%s0] sm:$0xff]
  %v21 = vld [vmem:[%s1] sm:$0xff]
  %v22 = vld [vmem:[%s1 + $0x8] sm:$0xff]
  %v23 = vld [vmem:[%s1 + $0x10] sm:$0xff]
  %v24 = vld [vmem:[%s1 + $0x18] sm:$0xff]
  %v25 = vld [vmem:[%s1 + $0x20] sm:$0xff]
  %v26 = vld [vmem:[%s1 + $0x28] sm:$0xff]
  %v27 = vld [vmem:[%s1 + $0x30] sm:$0xff]
  %v28 = vld [vmem:[%s1 + $0x38] sm:$0xff]
  %v29 = vld [vmem:[%s1 + $0x40] sm:$0xff]
  %v30 = vld [vmem:[%s1 + $0x48] sm:$0xff]
  %v31 = vld [vmem:[%s1 + $0x50] sm:$0xff]
  %v32 = vld [vmem:[%s1 + $0x58] sm:$0xff]
  %v33 = vld [vmem:[%s1 + $0x60] sm:$0xff]
  %v34 = vld [vmem:[%s1 + $0x68] sm:$0xff]
  %v35 = vld [vmem:[%s1 + $0x70] sm:$0xff]
  %v36 = vld [vmem:[%s1 + $0x78] sm:$0xff]
  %37 = vmatprep.subr.mxu0 0.0
  %38 = vmatpush1.msra.mxu0 %v21
  %39 = vmatprep.subr.mxu0 0.0
  %40 = vmatpush1.msra.mxu0 %v22
  %41 = vmatprep.subr.mxu0 0.0
  %42 = vmatpush1.msra.mxu0 %v23
  %43 = vmatprep.subr.mxu0 0.0
  %44 = vmatpush1.msra.mxu0 %v24
  %45 = vmatprep.subr.mxu0 0.0
  %46 = vmatpush1.msra.mxu0 %v25
  %47 = vmatprep.subr.mxu0 0.0
  %48 = vmatpush1.msra.mxu0 %v26
  %49 = vmatprep.subr.mxu0 0.0
  %50 = vmatpush1.msra.mxu0 %v27
  %51 = vmatprep.subr.mxu0 0.0
  %52 = vmatpush1.msra.mxu0 %v28
  %53 = vmatprep.subr.mxu0 0.0
  %54 = vmatpush1.msra.mxu0 %v29
  %55 = vmatprep.subr.mxu0 0.0
  %56 = vmatpush1.msra.mxu0 %v30
  %57 = vmatprep.subr.mxu0 0.0
  %58 = vmatpush1.msra.mxu0 %v31
  %59 = vmatprep.subr.mxu0 0.0
  %60 = vmatpush1.msra.mxu0 %v32
  %61 = vmatprep.subr.mxu0 0.0
  %62 = vmatpush1.msra.mxu0 %v33
  %63 = vmatprep.subr.mxu0 0.0
  %64 = vmatpush1.msra.mxu0 %v34
  %65 = vmatprep.subr.mxu0 0.0
  %66 = vmatpush1.msra.mxu0 %v35
  %67 = vmatprep.subr.mxu0 0.0
  %68 = vmatpush1.msra.mxu0 %v36
  %69 = vmatprep.subr.mxu0 0.0
  %70 = vmatpush1.msra.mxu0 0.0
  %71 = vmatprep.subr.mxu0 0.0
  %72 = vmatpush1.msra.mxu0 0.0
  %73 = vmatprep.subr.mxu0 0.0
  %74 = vmatpush1.msra.mxu0 0.0
  %75 = vmatprep.subr.mxu0 0.0
  %76 = vmatpush1.msra.mxu0 0.0
  %77 = vmatprep.subr.mxu0 0.0
  %78 = vmatpush1.msra.mxu0 0.0
  %79 = vmatprep.subr.mxu0 0.0
  %80 = vmatpush1.msra.mxu0 0.0
  %81 = vmatprep.subr.mxu0 0.0
  %82 = vmatpush1.msra.mxu0 0.0
  %83 = vmatprep.subr.mxu0 0.0
  %84 = vmatpush1.msra.mxu0 0.0
  %85 = vmatprep.subr.mxu0 0.0
  %86 = vmatpush1.msra.mxu0 0.0
  %87 = vmatprep.subr.mxu0 0.0
  %88 = vmatpush1.msra.mxu0 0.0
  %89 = vmatprep.subr.mxu0 0.0
  %90 = vmatpush1.msra.mxu0 0.0
  %91 = vmatprep.subr.mxu0 0.0
  %92 = vmatpush1.msra.mxu0 0.0
  %93 = vmatprep.subr.mxu0 0.0
  %94 = vmatpush1.msra.mxu0 0.0
  %95 = vmatprep.subr.mxu0 0.0
  %96 = vmatpush1.msra.mxu0 0.0
  %97 = vmatprep.subr.mxu0 0.0
  %98 = vmatpush1.msra.mxu0 0.0
  %99 = vmatprep.subr.mxu0 0.0
  %100 = vmatpush1.msra.mxu0 0.0
  %101 = vmatprep.mubr.f32.mxu0 0.0
  %102 = vmatmul.mubr.f32.gmra.mrb[0].mxu0 %v20
  %v103 = vpop.f32.mrb[0].mxu0
  %v104 = vadd.f32 0.0, %v103
  %v105 = vpop.f32.mrb[0].mxu0
  %106 = vdwg.mxu0
  %107 = vst [vmem:[%s2] sm:$0xff] %v104
  %v108 = vld [vmem:[#allocation2] sm:$0x1]
  %v109 = vrot.slane %v104, 4
  %v110 = vadd.f32 %v104, %v109
  %v111 = vrot.slane %v110, 2
  %v112 = vadd.f32 %v110, %v111
  %v113 = vrot.slane %v112, 1
  %v114 = vadd.f32 %v112, %v113
  %v115 = vadd.f32 %v108, %v114
  %116 = vst [vmem:[#allocation2] sm:$0x1] %v115
  %v117 = vld [vmem:[#allocation3] sm:$0x1]
  %v118 = vmul.f32 %v104, %v104
  %v119 = vrot.slane %v118, 4
  %v120 = vadd.f32 %v118, %v119
  %v121 = vrot.slane %v120, 2
  %v122 = vadd.f32 %v120, %v121
  %v123 = vrot.slane %v122, 1
  %v124 = vadd.f32 %v122, %v123
  %v125 = vadd.f32 %v117, %v124
  %126 = vst [vmem:[#allocation3] sm:$0x1] %v125
  // Predicated region
  $region14: #{siamese_arm_forward.6} parent=0 // pred_check
    %p127 = pneg %p14
  $region15: #{siamese_arm_forward.6} parent=0 // pred_check_branch
    %129 = sbr.rel (%p127) target = $region17
  $region16: #{siamese_arm_forward.6} parent=0 // pred_region
    %v130 = vld [vmem:[#allocation2] sm:$0x1]
    %131 = vst [vmem:[%s3] sm:$0x1] %v130
    %v132 = vld [vmem:[#allocation3] sm:$0x1]
    %133 = vst [vmem:[%s4] sm:$0x1] %v132
  $region17: #{siamese_arm_forward.6} parent=0 // pred_fallthru
    _
  // Predicated region
  $region18: #{siamese_arm_forward.6} parent=0 // pred_check
    _
  $region19: #{siamese_arm_forward.6} parent=0 // pred_check_branch
    %135 = sbr.rel (0) target = $region21
  $region20: #{siamese_arm_forward.6} parent=0 // pred_region
    _
  $region21: #{siamese_arm_forward.6} parent=0 // pred_fallthru
    _
  // Predicated region
  $region22: #{siamese_arm_forward.6} parent=0 // pred_check
    _
  $region23: #{siamese_arm_forward.6} parent=0 // pred_check_branch
    %137 = sbr.rel (0) target = $region25
  $region24: #{siamese_arm_forward.6} parent=0 // pred_region
    _
  $region25: #{siamese_arm_forward.6} parent=0 // pred_fallthru
    _
  // Predicated region
  $region26: #{siamese_arm_forward.6} parent=0 // pred_check
    _
  $region27: #{siamese_arm_forward.6} parent=0 // pred_check_branch
    %139 = sbr.rel (0) target = $region29
  $region28: #{siamese_arm_forward.6} parent=0 // pred_region
    _
  $region29: #{siamese_arm_forward.6} parent=0 // pred_fallthru
    _
  // Predicated region
  $region30: #{siamese_arm_forward.6} parent=0 // pred_check
    _
  $region31: #{siamese_arm_forward.6} parent=0 // pred_check_branch
    %141 = sbr.rel (0) target = $region33
  $region32: #{siamese_arm_forward.6} parent=0 // pred_region
    _
  $region33: #{siamese_arm_forward.6} parent=0 // pred_fallthru
    _
  // Predicated region
  $region34: #{siamese_arm_forward.6} parent=0 // pred_check
    _
  $region35: #{siamese_arm_forward.6} parent=0 // pred_check_branch
    %143 = sbr.rel (0) target = $region37
  $region36: #{siamese_arm_forward.6} parent=0 // pred_region
    _
  $region37: #{siamese_arm_forward.6} parent=0 // pred_fallthru
    _
  // Predicated region
  $region38: #{siamese_arm_forward.6} parent=0 // pred_check
    _
  $region39: #{siamese_arm_forward.6} parent=0 // pred_check_branch
    %145 = sbr.rel (0) target = $region41
  $region40: #{siamese_arm_forward.6} parent=0 // pred_region
    _
  $region41: #{siamese_arm_forward.6} parent=0 // pred_fallthru
    _

// kernel: siamese_arm_forward.7
$region0: #{siamese_arm_forward.7}
  #allocation0 [shape = 'u32[]', space=smem, size = 0x4, offset = 0x4, fixed_abs, tag = 'smem constant byte address 0x4 - core index']
  #allocation1 [shape = 'u32[144,128]{1,0:T(1,128)}', space=vmem, size = 0x12000, scoped, tag = 'internal scratch']
  #allocation2 [shape = 'f32[1,128]{1,0:T(1,128)}', space=vmem, size = 0x200, scoped, tag = 'scratch operand']
  #allocation3 [shape = 'f32[1,128]{1,0:T(1,128)}', space=vmem, size = 0x200, scoped, tag = 'scratch operand']
  %s0 = inlined_call_operand.vmem [shape: f32[8,128], index: 0, kind: input, shape index: {}]
  %s1 = inlined_call_operand.vmem [shape: f32[1,128], index: 1, kind: input, shape index: {}]
  %s2 = inlined_call_operand.vmem [shape: f32[1,128], index: 2, kind: input, shape index: {}]
  %s3 = inlined_call_operand.vmem [shape: f32[128,128], index: 3, kind: input, shape index: {}]
  %s4 = inlined_call_operand.vmem [shape: f32[8,128], index: 4, kind: output, shape index: {0}]
  %s5 = inlined_call_operand.vmem [shape: f32[1,128], index: 5, kind: output, shape index: {1}]
  %s6 = inlined_call_operand.vmem [shape: f32[1,128], index: 6, kind: output, shape index: {2}]
  %7 = xla_tuple %s4, %s5, %s6
  %s8 = sld [smem:[#allocation0]]
  $region50: #{siamese_arm_forward.7} parent=0
    _
  %s10 = ssub.s32 1, %s8
  %s11 = scalar_select 0, %s10, %s8
  // Predicated region
  $region2: #{siamese_arm_forward.7} parent=0 // pred_check
    _
  $region3: #{siamese_arm_forward.7} parent=0 // pred_check_branch
    %13 = sbr.rel (0) target = $region5
  $region4: #{siamese_arm_forward.7} parent=0 // pred_region
    _
  $region5: #{siamese_arm_forward.7} parent=0 // pred_fallthru
    _
  // Predicated region
  $region6: #{siamese_arm_forward.7} parent=0 // pred_check
    _
  $region7: #{siamese_arm_forward.7} parent=0 // pred_check_branch
    %15 = sbr.rel (0) target = $region9
  $region8: #{siamese_arm_forward.7} parent=0 // pred_region
    _
  $region9: #{siamese_arm_forward.7} parent=0 // pred_fallthru
    _
  // Predicated region
  $region10: #{siamese_arm_forward.7} parent=0 // pred_check
    _
  $region11: #{siamese_arm_forward.7} parent=0 // pred_check_branch
    %17 = sbr.rel (0) target = $region13
  $region12: #{siamese_arm_forward.7} parent=0 // pred_region
    _
  $region13: #{siamese_arm_forward.7} parent=0 // pred_fallthru
    _
  // Predicated region
  $region14: #{siamese_arm_forward.7} parent=0 // pred_check
    _
  $region15: #{siamese_arm_forward.7} parent=0 // pred_check_branch
    %19 = sbr.rel (0) target = $region17
  $region16: #{siamese_arm_forward.7} parent=0 // pred_region
    _
  $region17: #{siamese_arm_forward.7} parent=0 // pred_fallthru
    _
  %p20 = scmp.eq.s32.totalorder 0, 0
  // Predicated region
  $region18: #{siamese_arm_forward.7} parent=0 // pred_check
    %p21 = pneg %p20
  $region19: #{siamese_arm_forward.7} parent=0 // pred_check_branch
    %23 = sbr.rel (%p21) target = $region21
  $region20: #{siamese_arm_forward.7} parent=0 // pred_region
    %24 = vst [vmem:[#allocation2] sm:$0x1] 0.0
    %25 = vst [vmem:[#allocation3] sm:$0x1] 0.0
  $region21: #{siamese_arm_forward.7} parent=0 // pred_fallthru
    _
  %v26 = vld [vmem:[%s0] sm:$0xff]
  %v27 = vld [vmem:[%s1] sm:$0x1]
  %v29 = vlaneseq
  %v30 = vshrl.u32 %v29, 7
  %v31 = vsub.s32 0, %v30
  %v32 = vrot.slane %v27, %v31
  %v34 = vmul.f32 %v26, %v32
  %v35 = vld [vmem:[%s2] sm:$0x1]
  %v37 = vlaneseq
  %v38 = vshrl.u32 %v37, 7
  %v39 = vsub.s32 0, %v38
  %v40 = vrot.slane %v35, %v39
  %v42 = vadd.f32 %v34, %v40
  %v43 = vmax.f32 %v42, 0.0
  %v44 = vld [vmem:[%s3] sm:$0xff]
  %v45 = vld [vmem:[%s3 + $0x8] sm:$0xff]
  %v46 = vld [vmem:[%s3 + $0x10] sm:$0xff]
  %v47 = vld [vmem:[%s3 + $0x18] sm:$0xff]
  %v48 = vld [vmem:[%s3 + $0x20] sm:$0xff]
  %v49 = vld [vmem:[%s3 + $0x28] sm:$0xff]
  %v50 = vld [vmem:[%s3 + $0x30] sm:$0xff]
  %v51 = vld [vmem:[%s3 + $0x38] sm:$0xff]
  %v52 = vld [vmem:[%s3 + $0x40] sm:$0xff]
  %v53 = vld [vmem:[%s3 + $0x48] sm:$0xff]
  %v54 = vld [vmem:[%s3 + $0x50] sm:$0xff]
  %v55 = vld [vmem:[%s3 + $0x58] sm:$0xff]
  %v56 = vld [vmem:[%s3 + $0x60] sm:$0xff]
  %v57 = vld [vmem:[%s3 + $0x68] sm:$0xff]
  %v58 = vld [vmem:[%s3 + $0x70] sm:$0xff]
  %v59 = vld [vmem:[%s3 + $0x78] sm:$0xff]
  %60 = vmatprep.subr.mxu0 0.0
  %61 = vmatpush1.msra.mxu0 %v44
  %62 = vmatprep.subr.mxu0 0.0
  %63 = vmatpush1.msra.mxu0 %v45
  %64 = vmatprep.subr.mxu0 0.0
  %65 = vmatpush1.msra.mxu0 %v46
  %66 = vmatprep.subr.mxu0 0.0
  %67 = vmatpush1.msra.mxu0 %v47
  %68 = vmatprep.subr.mxu0 0.0
  %69 = vmatpush1.msra.mxu0 %v48
  %70 = vmatprep.subr.mxu0 0.0
  %71 = vmatpush1.msra.mxu0 %v49
  %72 = vmatprep.subr.mxu0 0.0
  %73 = vmatpush1.msra.mxu0 %v50
  %74 = vmatprep.subr.mxu0 0.0
  %75 = vmatpush1.msra.mxu0 %v51
  %76 = vmatprep.subr.mxu0 0.0
  %77 = vmatpush1.msra.mxu0 %v52
  %78 = vmatprep.subr.mxu0 0.0
  %79 = vmatpush1.msra.mxu0 %v53
  %80 = vmatprep.subr.mxu0 0.0
  %81 = vmatpush1.msra.mxu0 %v54
  %82 = vmatprep.subr.mxu0 0.0
  %83 = vmatpush1.msra.mxu0 %v55
  %84 = vmatprep.subr.mxu0 0.0
  %85 = vmatpush1.msra.mxu0 %v56
  %86 = vmatprep.subr.mxu0 0.0
  %87 = vmatpush1.msra.mxu0 %v57
  %88 = vmatprep.subr.mxu0 0.0
  %89 = vmatpush1.msra.mxu0 %v58
  %90 = vmatprep.subr.mxu0 0.0
  %91 = vmatpush1.msra.mxu0 %v59
  %92 = vmatprep.subr.mxu0 0.0
  %93 = vmatpush1.msra.mxu0 0.0
  %94 = vmatprep.subr.mxu0 0.0
  %95 = vmatpush1.msra.mxu0 0.0
  %96 = vmatprep.subr.mxu0 0.0
  %97 = vmatpush1.msra.mxu0 0.0
  %98 = vmatprep.subr.mxu0 0.0
  %99 = vmatpush1.msra.mxu0 0.0
  %100 = vmatprep.subr.mxu0 0.0
  %101 = vmatpush1.msra.mxu0 0.0
  %102 = vmatprep.subr.mxu0 0.0
  %103 = vmatpush1.msra.mxu0 0.0
  %104 = vmatprep.subr.mxu0 0.0
  %105 = vmatpush1.msra.mxu0 0.0
  %106 = vmatprep.subr.mxu0 0.0
  %107 = vmatpush1.msra.mxu0 0.0
  %108 = vmatprep.subr.mxu0 0.0
  %109 = vmatpush1.msra.mxu0 0.0
  %110 = vmatprep.subr.mxu0 0.0
  %111 = vmatpush1.msra.mxu0 0.0
  %112 = vmatprep.subr.mxu0 0.0
  %113 = vmatpush1.msra.mxu0 0.0
  %114 = vmatprep.subr.mxu0 0.0
  %115 = vmatpush1.msra.mxu0 0.0
  %116 = vmatprep.subr.mxu0 0.0
  %117 = vmatpush1.msra.mxu0 0.0
  %118 = vmatprep.subr.mxu0 0.0
  %119 = vmatpush1.msra.mxu0 0.0
  %120 = vmatprep.subr.mxu0 0.0
  %121 = vmatpush1.msra.mxu0 0.0
  %122 = vmatprep.subr.mxu0 0.0
  %123 = vmatpush1.msra.mxu0 0.0
  %124 = vmatprep.mubr.f32.mxu0 0.0
  %125 = vmatmul.mubr.f32.gmra.mrb[0].mxu0 %v43
  %v126 = vpop.f32.mrb[0].mxu0
  %v127 = vadd.f32 0.0, %v126
  %v128 = vpop.f32.mrb[0].mxu0
  %129 = vdwg.mxu0
  %130 = vst [vmem:[%s4] sm:$0xff] %v127
  %v131 = vld [vmem:[#allocation2] sm:$0x1]
  %v132 = vrot.slane %v127, 4
  %v133 = vadd.f32 %v127, %v132
  %v134 = vrot.slane %v133, 2
  %v135 = vadd.f32 %v133, %v134
  %v136 = vrot.slane %v135, 1
  %v137 = vadd.f32 %v135, %v136
  %v138 = vadd.f32 %v131, %v137
  %139 = vst [vmem:[#allocation2] sm:$0x1] %v138
  %v140 = vld [vmem:[#allocation3] sm:$0x1]
  %v141 = vmul.f32 %v127, %v127
  %v142 = vrot.slane %v141, 4
  %v143 = vadd.f32 %v141, %v142
  %v144 = vrot.slane %v143, 2
  %v145 = vadd.f32 %v143, %v144
  %v146 = vrot.slane %v145, 1
  %v147 = vadd.f32 %v145, %v146
  %v148 = vadd.f32 %v140, %v147
  %149 = vst [vmem:[#allocation3] sm:$0x1] %v148
  // Predicated region
  $region22: #{siamese_arm_forward.7} parent=0 // pred_check
    %p150 = pneg %p20
  $region23: #{siamese_arm_forward.7} parent=0 // pred_check_branch
    %152 = sbr.rel (%p150) target = $region25
  $region24: #{siamese_arm_forward.7} parent=0 // pred_region
    %v153 = vld [vmem:[#allocation2] sm:$0x1]
    %154 = vst [vmem:[%s5] sm:$0x1] %v153
    %v155 = vld [vmem:[#allocation3] sm:$0x1]
    %156 = vst [vmem:[%s6] sm:$0x1] %v155
  $region25: #{siamese_arm_forward.7} parent=0 // pred_fallthru
    _
  // Predicated region
  $region26: #{siamese_arm_forward.7} parent=0 // pred_check
    _
  $region27: #{siamese_arm_forward.7} parent=0 // pred_check_branch
    %158 = sbr.rel (0) target = $region29
  $region28: #{siamese_arm_forward.7} parent=0 // pred_region
    _
  $region29: #{siamese_arm_forward.7} parent=0 // pred_fallthru
    _
  // Predicated region
  $region30: #{siamese_arm_forward.7} parent=0 // pred_check
    _
  $region31: #{siamese_arm_forward.7} parent=0 // pred_check_branch
    %160 = sbr.rel (0) target = $region33
  $region32: #{siamese_arm_forward.7} parent=0 // pred_region
    _
  $region33: #{siamese_arm_forward.7} parent=0 // pred_fallthru
    _
  // Predicated region
  $region34: #{siamese_arm_forward.7} parent=0 // pred_check
    _
  $region35: #{siamese_arm_forward.7} parent=0 // pred_check_branch
    %162 = sbr.rel (0) target = $region37
  $region36: #{siamese_arm_forward.7} parent=0 // pred_region
    _
  $region37: #{siamese_arm_forward.7} parent=0 // pred_fallthru
    _
  // Predicated region
  $region38: #{siamese_arm_forward.7} parent=0 // pred_check
    _
  $region39: #{siamese_arm_forward.7} parent=0 // pred_check_branch
    %164 = sbr.rel (0) target = $region41
  $region40: #{siamese_arm_forward.7} parent=0 // pred_region
    _
  $region41: #{siamese_arm_forward.7} parent=0 // pred_fallthru
    _
  // Predicated region
  $region42: #{siamese_arm_forward.7} parent=0 // pred_check
    _
  $region43: #{siamese_arm_forward.7} parent=0 // pred_check_branch
    %166 = sbr.rel (0) target = $region45
  $region44: #{siamese_arm_forward.7} parent=0 // pred_region
    _
  $region45: #{siamese_arm_forward.7} parent=0 // pred_fallthru
    _
  // Predicated region
  $region46: #{siamese_arm_forward.7} parent=0 // pred_check
    _
  $region47: #{siamese_arm_forward.7} parent=0 // pred_check_branch
    %168 = sbr.rel (0) target = $region49
  $region48: #{siamese_arm_forward.7} parent=0 // pred_region
    _
  $region49: #{siamese_arm_forward.7} parent=0 // pred_fallthru
    _

// kernel: siamese_arm_forward.11
$region0: #{siamese_arm_forward.11}
  #allocation0 [shape = 'u32[]', space=smem, size = 0x4, offset = 0x4, fixed_abs, tag = 'smem constant byte address 0x4 - core index']
  #allocation1 [shape = 'u32[144,128]{1,0:T(1,128)}', space=vmem, size = 0x12000, scoped, tag = 'internal scratch']
  %s0 = inlined_call_operand.vmem [shape: f32[8,128], index: 0, kind: input, shape index: {}]
  %s1 = inlined_call_operand.vmem [shape: f32[1,128], index: 1, kind: input, shape index: {}]
  %s2 = inlined_call_operand.vmem [shape: f32[1,128], index: 2, kind: input, shape index: {}]
  %s3 = inlined_call_operand.vmem [shape: f32[128,128], index: 3, kind: input, shape index: {}]
  %s4 = inlined_call_operand.vmem [shape: f32[1,128], index: 4, kind: input, shape index: {}]
  %s5 = inlined_call_operand.hbm [shape: f32[8,128], index: 5, kind: output, shape index: {}]
  %s6 = sld [smem:[#allocation0]]
  $region30: #{siamese_arm_forward.11} parent=0
    _
  %s8 = ssub.s32 1, %s6
  %s9 = scalar_select 0, %s8, %s6
  $region1: #{siamese_arm_forward.11} parent=0
    #allocation2 [shape = 'u8[4096]{0}', space=vmem, size = 0x1000, scoped, tag = 'output window, operand 0, single buffered']
    #allocation3 [shape = 's32[1]{0}', space=sflag, size = 0x4, scoped, tag = 'scoped memory for siamese_arm_forward.11']
    %10 = vsyncpa [#allocation3], 0
    // Predicated region
    $region2: #{siamese_arm_forward.11} parent=1 // pred_check
      _
    $region3: #{siamese_arm_forward.11} parent=1 // pred_check_branch
      %12 = sbr.rel (0) target = $region5
    $region4: #{siamese_arm_forward.11} parent=1 // pred_region
      _
    $region5: #{siamese_arm_forward.11} parent=1 // pred_fallthru
      _
    // Predicated region
    $region6: #{siamese_arm_forward.11} parent=1 // pred_check
      _
    $region7: #{siamese_arm_forward.11} parent=1 // pred_check_branch
      %14 = sbr.rel (0) target = $region9
    $region8: #{siamese_arm_forward.11} parent=1 // pred_region
      _
    $region9: #{siamese_arm_forward.11} parent=1 // pred_fallthru
      _
    // Predicated region
    $region10: #{siamese_arm_forward.11} parent=1 // pred_check
      _
    $region11: #{siamese_arm_forward.11} parent=1 // pred_check_branch
      %16 = sbr.rel (0) target = $region13
    $region12: #{siamese_arm_forward.11} parent=1 // pred_region
      _
    $region13: #{siamese_arm_forward.11} parent=1 // pred_fallthru
      _
    // Predicated region
    $region14: #{siamese_arm_forward.11} parent=1 // pred_check
      _
    $region15: #{siamese_arm_forward.11} parent=1 // pred_check_branch
      %18 = sbr.rel (0) target = $region17
    $region16: #{siamese_arm_forward.11} parent=1 // pred_region
      _
    $region17: #{siamese_arm_forward.11} parent=1 // pred_fallthru
      _
    // Predicated region
    $region18: #{siamese_arm_forward.11} parent=1 // pred_check
      _
    $region19: #{siamese_arm_forward.11} parent=1 // pred_check_branch
      %20 = sbr.rel (0) target = $region21
    $region20: #{siamese_arm_forward.11} parent=1 // pred_region
      _
    $region21: #{siamese_arm_forward.11} parent=1 // pred_fallthru
      _
    %v21 = vld [vmem:[%s0] sm:$0xff]
    %v22 = vld [vmem:[%s1] sm:$0x1]
    %v24 = vlaneseq
    %v25 = vshrl.u32 %v24, 7
    %v26 = vsub.s32 0, %v25
    %v27 = vrot.slane %v22, %v26
    %v29 = vmul.f32 %v21, %v27
    %v30 = vld [vmem:[%s2] sm:$0x1]
    %v32 = vlaneseq
    %v33 = vshrl.u32 %v32, 7
    %v34 = vsub.s32 0, %v33
    %v35 = vrot.slane %v30, %v34
    %v37 = vadd.f32 %v29, %v35
    %v38 = vmax.f32 %v37, 0.0
    %v39 = vld [vmem:[%s3] sm:$0xff]
    %v40 = vld [vmem:[%s3 + $0x8] sm:$0xff]
    %v41 = vld [vmem:[%s3 + $0x10] sm:$0xff]
    %v42 = vld [vmem:[%s3 + $0x18] sm:$0xff]
    %v43 = vld [vmem:[%s3 + $0x20] sm:$0xff]
    %v44 = vld [vmem:[%s3 + $0x28] sm:$0xff]
    %v45 = vld [vmem:[%s3 + $0x30] sm:$0xff]
    %v46 = vld [vmem:[%s3 + $0x38] sm:$0xff]
    %v47 = vld [vmem:[%s3 + $0x40] sm:$0xff]
    %v48 = vld [vmem:[%s3 + $0x48] sm:$0xff]
    %v49 = vld [vmem:[%s3 + $0x50] sm:$0xff]
    %v50 = vld [vmem:[%s3 + $0x58] sm:$0xff]
    %v51 = vld [vmem:[%s3 + $0x60] sm:$0xff]
    %v52 = vld [vmem:[%s3 + $0x68] sm:$0xff]
    %v53 = vld [vmem:[%s3 + $0x70] sm:$0xff]
    %v54 = vld [vmem:[%s3 + $0x78] sm:$0xff]
    %v55 = vld [vmem:[%s4] sm:$0x1]
    %v57 = vlaneseq
    %v58 = vshrl.u32 %v57, 7
    %v59 = vsub.s32 0, %v58
    %v60 = vrot.slane %v55, %v59
    %62 = vmatprep.subr.mxu0 0.0
    %63 = vmatpush1.msra.mxu0 %v39
    %64 = vmatprep.subr.mxu0 0.0
    %65 = vmatpush1.msra.mxu0 %v40
    %66 = vmatprep.subr.mxu0 0.0
    %67 = vmatpush1.msra.mxu0 %v41
    %68 = vmatprep.subr.mxu0 0.0
    %69 = vmatpush1.msra.mxu0 %v42
    %70 = vmatprep.subr.mxu0 0.0
    %71 = vmatpush1.msra.mxu0 %v43
    %72 = vmatprep.subr.mxu0 0.0
    %73 = vmatpush1.msra.mxu0 %v44
    %74 = vmatprep.subr.mxu0 0.0
    %75 = vmatpush1.msra.mxu0 %v45
    %76 = vmatprep.subr.mxu0 0.0
    %77 = vmatpush1.msra.mxu0 %v46
    %78 = vmatprep.subr.mxu0 0.0
    %79 = vmatpush1.msra.mxu0 %v47
    %80 = vmatprep.subr.mxu0 0.0
    %81 = vmatpush1.msra.mxu0 %v48
    %82 = vmatprep.subr.mxu0 0.0
    %83 = vmatpush1.msra.mxu0 %v49
    %84 = vmatprep.subr.mxu0 0.0
    %85 = vmatpush1.msra.mxu0 %v50
    %86 = vmatprep.subr.mxu0 0.0
    %87 = vmatpush1.msra.mxu0 %v51
    %88 = vmatprep.subr.mxu0 0.0
    %89 = vmatpush1.msra.mxu0 %v52
    %90 = vmatprep.subr.mxu0 0.0
    %91 = vmatpush1.msra.mxu0 %v53
    %92 = vmatprep.subr.mxu0 0.0
    %93 = vmatpush1.msra.mxu0 %v54
    %94 = vmatprep.subr.mxu0 0.0
    %95 = vmatpush1.msra.mxu0 0.0
    %96 = vmatprep.subr.mxu0 0.0
    %97 = vmatpush1.msra.mxu0 0.0
    %98 = vmatprep.subr.mxu0 0.0
    %99 = vmatpush1.msra.mxu0 0.0
    %100 = vmatprep.subr.mxu0 0.0
    %101 = vmatpush1.msra.mxu0 0.0
    %102 = vmatprep.subr.mxu0 0.0
    %103 = vmatpush1.msra.mxu0 0.0
    %104 = vmatprep.subr.mxu0 0.0
    %105 = vmatpush1.msra.mxu0 0.0
    %106 = vmatprep.subr.mxu0 0.0
    %107 = vmatpush1.msra.mxu0 0.0
    %108 = vmatprep.subr.mxu0 0.0
    %109 = vmatpush1.msra.mxu0 0.0
    %110 = vmatprep.subr.mxu0 0.0
    %111 = vmatpush1.msra.mxu0 0.0
    %112 = vmatprep.subr.mxu0 0.0
    %113 = vmatpush1.msra.mxu0 0.0
    %114 = vmatprep.subr.mxu0 0.0
    %115 = vmatpush1.msra.mxu0 0.0
    %116 = vmatprep.subr.mxu0 0.0
    %117 = vmatpush1.msra.mxu0 0.0
    %118 = vmatprep.subr.mxu0 0.0
    %119 = vmatpush1.msra.mxu0 0.0
    %120 = vmatprep.subr.mxu0 0.0
    %121 = vmatpush1.msra.mxu0 0.0
    %122 = vmatprep.subr.mxu0 0.0
    %123 = vmatpush1.msra.mxu0 0.0
    %124 = vmatprep.subr.mxu0 0.0
    %125 = vmatpush1.msra.mxu0 0.0
    %126 = vmatprep.mubr.f32.mxu0 0.0
    %127 = vmatmul.mubr.f32.gmra.mrb[0].mxu0 %v38
    %v128 = vpop.f32.mrb[0].mxu0
    %v129 = vadd.f32 %v60, %v128
    %v130 = vpop.f32.mrb[0].mxu0
    %131 = vdwg.mxu0
    %132 = vst [vmem:[#allocation2] sm:$0xff] %v129
    // Predicated region
    $region22: #{siamese_arm_forward.11} parent=1 // pred_check
      _
    $region23: #{siamese_arm_forward.11} parent=1 // pred_check_branch
      %134 = sbr.rel (0) target = $region25
    $region24: #{siamese_arm_forward.11} parent=1 // pred_region
      %s136 = ssub.s32 128, 128
      %137 = vsyncadd [#allocation3], %s136
      %s139 = sshll.u32 [#allocation2], 4
      %s140 = int_to_ptr.vmem [resolvable:$true] %s139
      %142 = dma.vmem_to_hbm [thread:$0]  %s140, 128, %s5, [#allocation3]
    $region25: #{siamese_arm_forward.11} parent=1 // pred_fallthru
      _
    // Predicated region
    $region26: #{siamese_arm_forward.11} parent=1 // pred_check
      _
    $region27: #{siamese_arm_forward.11} parent=1 // pred_check_branch
      %144 = sbr.rel (0) target = $region29
    $region28: #{siamese_arm_forward.11} parent=1 // pred_region
      %145 = dma.done [#allocation3], 128
    $region29: #{siamese_arm_forward.11} parent=1 // pred_fallthru
      _
    %146 = vsyncpa [#allocation3], 1

</llo_original>
